<compile_context>
chip_gen: v7x
topology: tpu7x:2x2x1
jax: 0.10.0
libtpu: 0.0.40
codegen_flags: <defaults>
</compile_context>

<pallas_src>
import functools

import jax
import jax.numpy as jnp
from jax.experimental import pallas as pl
from jax.experimental.pallas import tpu as pltpu


def _line_layer_kernel(x_ref, wf_ref, bf_ref, o_ref, acc_ref, *, inv_hw):
    """Grid: (batch, spatial_tiles); spatial tile axis is the reduction axis.

    x_ref  : (1, Cin, T)      spatial positions on the lane axis
    wf_ref : (Cin, binsP)     folded W1 @ W2, lane-padded to a multiple of 128
    bf_ref : (1, binsP)       folded b1 @ W2 + b2, lane-padded
    o_ref  : (1, 1, binsP)    per-batch output row (resident across reduction)
    acc_ref: (1, Cin) f32     running spatial sum
    """
    t = pl.program_id(1)

    @pl.when(t == 0)
    def _():
        acc_ref[...] = jnp.zeros_like(acc_ref)

    # Partial spatial sum for this tile (lane reduction on the XLU), f32 accumulate.
    acc_ref[...] += jnp.sum(x_ref[...].astype(jnp.float32), axis=2)      # (1, Cin)

    @pl.when(t == pl.num_programs(1) - 1)
    def _():
        pooled = acc_ref[...] * inv_hw                                   # (1, Cin)
        out = jnp.dot(pooled, wf_ref[...],
                      preferred_element_type=jnp.float32) + bf_ref[...]  # (1, binsP)
        o_ref[0] = out.astype(o_ref.dtype)


def _pick_spatial_tile(hw, cin, max_block_bytes=4 << 20):
    """Largest multiple-of-128 tile that divides HW and keeps the x block small
    enough that double-buffering fits comfortably even on v7x's 64 MiB VMEM.
    Falls back to the full spatial extent if HW has no multiple-of-128 divisor
    (full-extent block is always legal)."""
    cap = max(128, max_block_bytes // max(1, cin * 4))
    best = None
    for t in range(128, hw + 1, 128):
        if hw % t == 0 and t <= cap:
            best = t
    return best if best is not None else hw


def line_layer_pallas(x_nchw, w1, b1, w2, b2):
    """x_nchw: (B, Cin, H, W) float32.
    w1: (Cin, M), b1: (M,), w2: (M, bins), b2: (bins,) — the 1x1-conv weights as
    (in, out) matrices (PyTorch stores Conv2d weight as (out, in, 1, 1)).
    Returns (B, bins) — matches LineLayer.forward output of x.view(B, -1)."""
    B, Cin, H, W = x_nchw.shape
    HW = H * W
    bins = w2.shape[1]

    # Fold the two 1x1 convs around the (linear) global average pool.
    wf = jnp.dot(w1, w2)                                   # (Cin, bins)
    bf = jnp.dot(b1[None, :], w2) + b2[None, :]            # (1, bins)

    # Lane-dense output: pad the tiny bins dim to a multiple of 128 so the final
    # store is an unmasked full-lane vst.
    LANE = 128
    bins_p = ((bins + LANE - 1) // LANE) * LANE
    if bins_p != bins:
        wf = jnp.pad(wf, ((0, 0), (0, bins_p - bins)))
        bf = jnp.pad(bf, ((0, 0), (0, bins_p - bins)))

    # Free reshape (no transpose, no extra HBM pass): NCHW -> (B, Cin, H*W).
    x = x_nchw.reshape(B, Cin, HW)

    T = _pick_spatial_tile(HW, Cin)
    n_t = HW // T

    kernel = functools.partial(_line_layer_kernel, inv_hw=1.0 / float(HW))

    out3d = pl.pallas_call(
        kernel,
        out_shape=jax.ShapeDtypeStruct((B, 1, bins_p), jnp.float32),
        grid_spec=pltpu.PrefetchScalarGridSpec(
            num_scalar_prefetch=0,
            grid=(B, n_t),                      # batch parallel, spatial reduction last
            in_specs=[
                pl.BlockSpec((1, Cin, T), lambda b, t: (b, 0, t)),
                pl.BlockSpec((Cin, bins_p), lambda b, t: (0, 0)),   # resident constant
                pl.BlockSpec((1, bins_p), lambda b, t: (0, 0)),     # resident constant
            ],
            out_specs=pl.BlockSpec((1, 1, bins_p), lambda b, t: (b, 0, 0)),
            scratch_shapes=[pltpu.VMEM((1, Cin), jnp.float32)],
        ),
        compiler_params=pltpu.CompilerParams(
            dimension_semantics=("parallel", "arbitrary")),
    )(x, wf, bf)

    return out3d.reshape(B, bins_p)[:, :bins]


def line_layer_ref(x_nchw, w1, b1, w2, b2):
    """Pure-JAX reference mirroring the PyTorch forward (NCHW semantics)."""
    x = jnp.einsum('bchw,cm->bmhw', x_nchw, w1) + b1[None, :, None, None]
    x = jnp.mean(x, axis=(2, 3), keepdims=True)            # (B, M, 1, 1)
    x = jnp.einsum('bmhw,mk->bkhw', x, w2) + b2[None, :, None, None]
    return x.reshape(x.shape[0], -1)                       # (B, bins)


if __name__ == "__main__":
    # Small shapes consistent with the module's forward.
    B, Cin, H, W = 2, 4, 16, 16
    num_middle = 128   # stand-in for the default 1024 (kept small)
    num_bins = 8

    key = jax.random.PRNGKey(0)
    kx, k1, kb1, k2, kb2 = jax.random.split(key, 5)

    x = jax.random.normal(kx, (B, Cin, H, W), dtype=jnp.float32)
    # 1x1-conv weights stored as (in, out) matrices (PyTorch (out,in,1,1) transposed).
    w1 = jax.random.normal(k1, (Cin, num_middle), dtype=jnp.float32) * 0.1
    b1 = jax.random.normal(kb1, (num_middle,), dtype=jnp.float32) * 0.1
    w2 = jax.random.normal(k2, (num_middle, num_bins), dtype=jnp.float32) * 0.1
    b2 = jax.random.normal(kb2, (num_bins,), dtype=jnp.float32) * 0.1

    out = line_layer_pallas(x, w1, b1, w2, b2)
    out = jax.block_until_ready(out)

    ref = line_layer_ref(x, w1, b1, w2, b2)
    assert out.shape == (B, num_bins)
    assert jnp.allclose(out, ref, atol=1e-4, rtol=1e-4), "mismatch vs reference"

    print("KERNEL_OK")
</pallas_src>

<mosaic_0001>
module attributes {stable_mosaic.version = 11 : i64} {
  func.func @_line_layer_kernel(%arg0: i32, %arg1: i32, %arg2: memref<1x4x256xf32, #tpu.memory_space<vmem>>, %arg3: memref<4x128xf32, #tpu.memory_space<vmem>>, %arg4: memref<1x128xf32, #tpu.memory_space<vmem>>, %arg5: memref<1x1x128xf32, #tpu.memory_space<vmem>>, %arg6: memref<1x4xf32, #tpu.memory_space<vmem>>) attributes {dimension_semantics = [#tpu.dimension_semantics<parallel>, #tpu.dimension_semantics<arbitrary>], iteration_bounds = array<i64: 2, 1>, scalar_prefetch = 0 : i64, scratch_operands = 1 : i64, tpu.core_type = #tpu.core_type<tc>, window_params = [{transform_indices = @transform_0, window_bounds = array<i64: 1, 4, 256>}, {pipeline_mode = #tpu.pipeline_mode<synchronous>, transform_indices = @transform_1, window_bounds = array<i64: 4, 128>}, {pipeline_mode = #tpu.pipeline_mode<synchronous>, transform_indices = @transform_2, window_bounds = array<i64: 1, 128>}, {transform_indices = @transform_3, window_bounds = array<i64: 1, 1, 128>}]} {
    %c0_i32 = arith.constant 0 : i32
    %0 = arith.cmpi eq, %arg1, %c0_i32 : i32
    %1 = arith.extui %0 : i1 to i32
    %c0_i32_0 = arith.constant 0 : i32
    %2 = arith.cmpi ne, %1, %c0_i32_0 : i32
    scf.if %2 {
      %cst_9 = arith.constant 0.000000e+00 : f32
      %11 = vector.broadcast %cst_9 : f32 to vector<1x4xf32>
      %c0_10 = arith.constant 0 : index
      %c0_11 = arith.constant 0 : index
      %12 = vector.load %arg6[%c0_10, %c0_11] : memref<1x4xf32, #tpu.memory_space<vmem>>, vector<1x4xf32>
      tpu.vector_store %arg6[%c0_10, %c0_11], %11 {strides = array<i32>} : memref<1x4xf32, #tpu.memory_space<vmem>>, vector<1x4xf32>,
    } else {
    }
    %c0 = arith.constant 0 : index
    %c0_1 = arith.constant 0 : index
    %3 = vector.load %arg6[%c0, %c0_1] : memref<1x4xf32, #tpu.memory_space<vmem>>, vector<1x4xf32>
    %c0_2 = arith.constant 0 : index
    %c0_3 = arith.constant 0 : index
    %c0_4 = arith.constant 0 : index
    %4 = vector.load %arg2[%c0_2, %c0_3, %c0_4] : memref<1x4x256xf32, #tpu.memory_space<vmem>>, vector<1x4x256xf32>
    %cst = arith.constant dense<0.000000e+00> : vector<1x4xf32>
    %5 = vector.multi_reduction <add>, %4, %cst [2] : vector<1x4x256xf32> to vector<1x4xf32>
    %6 = arith.addf %3, %5 : vector<1x4xf32>
    %c0_5 = arith.constant 0 : index
    %c0_6 = arith.constant 0 : index
    %7 = vector.load %arg6[%c0_5, %c0_6] : memref<1x4xf32, #tpu.memory_space<vmem>>, vector<1x4xf32>
    tpu.vector_store %arg6[%c0_5, %c0_6], %6 {strides = array<i32>} : memref<1x4xf32, #tpu.memory_space<vmem>>, vector<1x4xf32>,
    %c0_i32_7 = arith.constant 0 : i32
    %8 = arith.cmpi eq, %arg1, %c0_i32_7 : i32
    %9 = arith.extui %8 : i1 to i32
    %c0_i32_8 = arith.constant 0 : i32
    %10 = arith.cmpi ne, %9, %c0_i32_8 : i32
    scf.if %10 {
      %c0_9 = arith.constant 0 : index
      %c0_10 = arith.constant 0 : index
      %11 = vector.load %arg6[%c0_9, %c0_10] : memref<1x4xf32, #tpu.memory_space<vmem>>, vector<1x4xf32>
      %cst_11 = arith.constant 3.906250e-03 : f32
      %12 = vector.broadcast %cst_11 : f32 to vector<1x4xf32>
      %13 = arith.mulf %11, %12 : vector<1x4xf32>
      %c0_12 = arith.constant 0 : index
      %c0_13 = arith.constant 0 : index
      %14 = vector.load %arg3[%c0_12, %c0_13] : memref<4x128xf32, #tpu.memory_space<vmem>>, vector<4x128xf32>
      %cst_14 = arith.constant dense<0.000000e+00> : vector<1x128xf32>
      %15 = tpu.matmul %13, %14, %cst_14 {dimension_numbers = #tpu.dot_dimension_numbers<[1], [0], [0], [1], [0, 0, 1, 1], [], []>} : vector<1x4xf32>, vector<4x128xf32>, vector<1x128xf32> -> vector<1x128xf32>
      %c0_15 = arith.constant 0 : index
      %c0_16 = arith.constant 0 : index
      %16 = vector.load %arg4[%c0_15, %c0_16] : memref<1x128xf32, #tpu.memory_space<vmem>>, vector<1x128xf32>
      %17 = arith.addf %15, %16 : vector<1x128xf32>
      %c0_17 = arith.constant 0 : index
      %c0_18 = arith.constant 0 : index
      %c0_19 = arith.constant 0 : index
      %18 = vector.load %arg5[%c0_17, %c0_18, %c0_19] : memref<1x1x128xf32, #tpu.memory_space<vmem>>, vector<1x1x128xf32>
      %19 = vector.shape_cast %18 : vector<1x1x128xf32> to vector<1x128xf32>
      %20 = vector.shape_cast %17 : vector<1x128xf32> to vector<1x1x128xf32>
      tpu.vector_store %arg5[%c0_17, %c0_18, %c0_19], %20 {strides = array<i32>} : memref<1x1x128xf32, #tpu.memory_space<vmem>>, vector<1x1x128xf32>,
    } else {
    }
    return
  }
  func.func @transform_0(%arg0: i32, %arg1: i32) -> (i32, i32, i32) {
    %c0_i32 = arith.constant 0 : i32
    %c0_i32_0 = arith.constant 0 : i32
    return %arg0, %c0_i32, %arg1 : i32, i32, i32
  }
  func.func @transform_1(%arg0: i32, %arg1: i32) -> (i32, i32) {
    %c0_i32 = arith.constant 0 : i32
    %c0_i32_0 = arith.constant 0 : i32
    %c0_i32_1 = arith.constant 0 : i32
    return %c0_i32, %c0_i32_0 : i32, i32
  }
  func.func @transform_2(%arg0: i32, %arg1: i32) -> (i32, i32) {
    %c0_i32 = arith.constant 0 : i32
    %c0_i32_0 = arith.constant 0 : i32
    %c0_i32_1 = arith.constant 0 : i32
    return %c0_i32, %c0_i32_0 : i32, i32
  }
  func.func @transform_3(%arg0: i32, %arg1: i32) -> (i32, i32, i32) {
    %c0_i32 = arith.constant 0 : i32
    %c0_i32_0 = arith.constant 0 : i32
    %c0_i32_1 = arith.constant 0 : i32
    return %arg0, %c0_i32, %c0_i32_0 : i32, i32, i32
  }
}

</mosaic_0001>

<llo_original>
// kernel: tpu_custom_call.1
$region0: #{tpu_custom_call.1}
  #allocation0 [shape = 'u32[]', space=smem, size = 0x4, offset = 0x4, fixed_abs, tag = 'smem constant byte address 0x4 - core index']
  #allocation1 [shape = 'u32[144,128]{1,0:T(1,128)}', space=vmem, size = 0x12000, scoped, tag = 'internal scratch']
  #allocation2 [shape = 'f32[1,4]{1,0:T(1,128)}', space=vmem, size = 0x200, scoped, tag = 'scratch operand']
  %s0 = inlined_call_operand.hbm [shape: f32[2,4,256], index: 0, kind: input, shape index: {}]
  %s1 = inlined_call_operand.hbm [shape: f32[4,128], index: 1, kind: input, shape index: {}]
  %s2 = inlined_call_operand.vmem [shape: f32[1,128], index: 2, kind: input, shape index: {}]
  %s3 = inlined_call_operand.hbm [shape: f32[2,1,128], index: 3, kind: output, shape index: {}]
  %s4 = sld [smem:[#allocation0]]
  $region61: #{tpu_custom_call.1} parent=0
    _
  %s6 = ssub.s32 1, %s4
  %s7 = scalar_select 0, %s6, %s4
  $region1: #{tpu_custom_call.1} parent=0
    #allocation3 [shape = 'u8[8192]{0}', space=vmem, size = 0x2000, scoped, tag = 'input window, operand 0']
    #allocation4 [shape = 's32[2]{0}', space=sflag, size = 0x8, scoped, tag = 'scoped memory for tpu_custom_call.1']
    #allocation5 [shape = 's32[2]{0}', space=sflag, size = 0x8, scoped, tag = 'scoped memory for tpu_custom_call.1']
    #allocation6 [shape = 'u8[2048]{0}', space=vmem, size = 0x800, scoped, tag = 'input window, operand 1, single buffered']
    #allocation7 [shape = 's32[1]{0}', space=sflag, size = 0x4, scoped, tag = 'scoped memory for tpu_custom_call.1']
    #allocation8 [shape = 'u8[1024]{0}', space=vmem, size = 0x400, scoped, tag = 'output window, operand 0']
    %8 = vsyncpa [#allocation4], 0
    %s9 = scalar_lea.sflag [#allocation4], 1
    %10 = vsyncpa %s9, 0
    %11 = vsyncpa [#allocation7], 0
    %12 = vsyncpa [#allocation5], 0
    %s13 = scalar_lea.sflag [#allocation5], 1
    %14 = vsyncpa %s13, 0
    loop: start=0, step=1, limit=4
    $region2: #{tpu_custom_call.1} parent=1 // loop_pre_header
      _
    $region3: #{tpu_custom_call.1} parent=1 // loop_header
      %s16 = sphi 0, %s20
      %p17 = scmp.ge.s32.totalorder %s16, 4
      %s23 = sphi 0, %s35
      %s24 = sphi 0, %s31
      %s25 = sphi 0, %s23
      %s26 = sphi 0, %s24
      %s27 = sphi 0, %s25
      %s28 = sphi 0, %s26
      %s40 = sphi 0, %s42
      %s43 = sphi 0, %s40
      %s44 = sphi 0, %s43
      %s60 = sphi 0, %s44
      %s64 = sphi 0, %s64
      %s66 = sphi 0, %s64
      %s67 = sphi 0, %s66
      %s81 = sphi 0, %s67
      %s85 = sphi 0, %s85
      %s87 = sphi 0, %s85
      %s88 = sphi 0, %s87
      %s102 = sphi 0, %s88
      %s108 = sphi 0, %s110
      %s111 = sphi 0, %s108
      %s112 = sphi 0, %s111
      %s128 = sphi 0, %s112
    $region4: #{tpu_custom_call.1} parent=1 // loop_header_branch
      %19 = sbr.rel (%p17) target = $region8
    $region5: #{tpu_custom_call.1} parent=1 // loop_body
      %s21 = ssub.s32 %s16, 1
      %s22 = ssub.s32 %s16, 2
      %s29 = sadd.s32 1, %s24
      %p30 = scmp.ge.s32.totalorder %s29, 1
      %s31 = scalar_select %p30, 0, %s29
      %s32 = sadd.s32 1, %s23
      %s33 = scalar_select %p30, %s32, %s23
      %p34 = scmp.ge.s32.totalorder %s33, 2
      %s35 = scalar_select %p34, 0, %s33
      %s36 = ssub.s32 %s23, %s35
      %s37 = ssub.s32 %s24, %s31
      %s38 = sor.u32 %s36, %s37
      %p39 = scmp.eq.s32.totalorder %s38, 0
      %s41 = sadd.s32 %s40, 1
      %s42 = scalar_select %p39, %s40, %s41
      %p45 = pneg %p39
      %p46 = scmp.eq.s32.totalorder %s16, 1
      %p47 = por %p45, %p46
      %p48 = scmp.ne.s32.totalorder %s40, %s43
      %p49 = scmp.eq.s32.totalorder %s16, 0
      %p50 = por %p48, %p49
      %p51 = scmp.ne.s32.totalorder %s40, %s43
      %p52 = scmp.eq.s32.totalorder %s21, 1
      %p53 = por %p51, %p52
      %p54 = scmp.ne.s32.totalorder %s43, %s44
      %p55 = scmp.eq.s32.totalorder %s21, 0
      %p56 = por %p54, %p55
      %p57 = scmp.ne.s32.totalorder %s43, %s44
      %p58 = scmp.eq.s32.totalorder %s22, 1
      %p59 = por %p57, %p58
      %p61 = scmp.ne.s32.totalorder %s44, %s60
      %p62 = scmp.eq.s32.totalorder %s22, 0
      %p63 = por %p61, %p62
      %s65 = sadd.s32 %s64, 1
      %p68 = scmp.eq.s32.totalorder %s16, 1
      %p69 = scmp.ne.s32.totalorder %s64, %s66
      %p70 = scmp.eq.s32.totalorder %s16, 0
      %p71 = por %p69, %p70
      %p72 = scmp.ne.s32.totalorder %s64, %s66
      %p73 = scmp.eq.s32.totalorder %s21, 1
      %p74 = por %p72, %p73
      %p75 = scmp.ne.s32.totalorder %s66, %s67
      %p76 = scmp.eq.s32.totalorder %s21, 0
      %p77 = por %p75, %p76
      %p78 = scmp.ne.s32.totalorder %s66, %s67
      %p79 = scmp.eq.s32.totalorder %s22, 1
      %p80 = por %p78, %p79
      %p82 = scmp.ne.s32.totalorder %s67, %s81
      %p83 = scmp.eq.s32.totalorder %s22, 0
      %p84 = por %p82, %p83
      %s86 = sadd.s32 %s85, 1
      %p89 = scmp.eq.s32.totalorder %s16, 1
      %p90 = scmp.ne.s32.totalorder %s85, %s87
      %p91 = scmp.eq.s32.totalorder %s16, 0
      %p92 = por %p90, %p91
      %p93 = scmp.ne.s32.totalorder %s85, %s87
      %p94 = scmp.eq.s32.totalorder %s21, 1
      %p95 = por %p93, %p94
      %p96 = scmp.ne.s32.totalorder %s87, %s88
      %p97 = scmp.eq.s32.totalorder %s21, 0
      %p98 = por %p96, %p97
      %p99 = scmp.ne.s32.totalorder %s87, %s88
      %p100 = scmp.eq.s32.totalorder %s22, 1
      %p101 = por %p99, %p100
      %p103 = scmp.ne.s32.totalorder %s88, %s102
      %p104 = scmp.eq.s32.totalorder %s22, 0
      %p105 = por %p103, %p104
      %s106 = ssub.s32 %s23, %s35
      %p107 = scmp.eq.s32.totalorder %s106, 0
      %s109 = sadd.s32 %s108, 1
      %s110 = scalar_select %p107, %s108, %s109
      %p113 = pneg %p107
      %p114 = scmp.eq.s32.totalorder %s16, 1
      %p115 = por %p113, %p114
      %p116 = scmp.ne.s32.totalorder %s108, %s111
      %p117 = scmp.eq.s32.totalorder %s16, 0
      %p118 = por %p116, %p117
      %p119 = scmp.ne.s32.totalorder %s108, %s111
      %p120 = scmp.eq.s32.totalorder %s21, 1
      %p121 = por %p119, %p120
      %p122 = scmp.ne.s32.totalorder %s111, %s112
      %p123 = scmp.eq.s32.totalorder %s21, 0
      %p124 = por %p122, %p123
      %p125 = scmp.ne.s32.totalorder %s111, %s112
      %p126 = scmp.eq.s32.totalorder %s22, 1
      %p127 = por %p125, %p126
      %p129 = scmp.ne.s32.totalorder %s112, %s128
      %p130 = scmp.eq.s32.totalorder %s22, 0
      %p131 = por %p129, %p130
      %p132 = scmp.le.s32.totalorder 1, %s16
      %p133 = scmp.lt.s32.totalorder %s16, 3
      %p134 = pnand %p132, %p133
      %p135 = pneg %p134
      // Predicated region
      $region9: #{tpu_custom_call.1} parent=5 // pred_check
        _
      $region10: #{tpu_custom_call.1} parent=5 // pred_check_branch
        %137 = sbr.rel (%p134) target = $region12
      $region11: #{tpu_custom_call.1} parent=5 // pred_region
        %s138 = ssub.s32 %s16, 1
        // Predicated region
        $region13: #{tpu_custom_call.1} parent=11 // pred_check
          %p139 = pneg %p77
        $region14: #{tpu_custom_call.1} parent=11 // pred_check_branch
          %141 = sbr.rel (%p139) target = $region16
        $region15: #{tpu_custom_call.1} parent=11 // pred_region
          %s143 = ssub.s32 64, 64
          %144 = vsyncadd [#allocation7], %s143
          %s146 = sshll.u32 [#allocation6], 4
          %s147 = int_to_ptr.vmem [resolvable:$true] %s146
          %149 = dma.hbm_to_vmem [thread:$0]  %s1, 64, %s147, [#allocation7]
        $region16: #{tpu_custom_call.1} parent=11 // pred_fallthru
          _
        // Predicated region
        $region17: #{tpu_custom_call.1} parent=11 // pred_check
          %p150 = pneg %p98
        $region18: #{tpu_custom_call.1} parent=11 // pred_check_branch
          %152 = sbr.rel (%p150) target = $region20
        $region19: #{tpu_custom_call.1} parent=11 // pred_region
          _
        $region20: #{tpu_custom_call.1} parent=11 // pred_fallthru
          _
      $region12: #{tpu_custom_call.1} parent=5 // pred_fallthru
        _
      %p153 = scmp.lt.s32.totalorder %s16, 2
      // Predicated region
      $region21: #{tpu_custom_call.1} parent=5 // pred_check
        %p154 = pneg %p153
      $region22: #{tpu_custom_call.1} parent=5 // pred_check_branch
        %156 = sbr.rel (%p154) target = $region24
      $region23: #{tpu_custom_call.1} parent=5 // pred_region
        // Predicated region
        $region25: #{tpu_custom_call.1} parent=23 // pred_check
          %p157 = pneg %p50
        $region26: #{tpu_custom_call.1} parent=23 // pred_check_branch
          %159 = sbr.rel (%p157) target = $region28
        $region27: #{tpu_custom_call.1} parent=23 // pred_region
          %s160 = sand.u32 %s40, 1
          %s161 = scalar_lea.sflag [#allocation4], %s160
          %s162 = sand.u32 %s40, 1
          %s163 = smul.addr %s162, 8
          %s164 = scalar_lea.vmem [#allocation3], %s163
          %s165 = smul.u32 2, %s24
          %s167 = ssub.s32 128, 128
          %168 = vsyncadd %s161, %s167
          %s169 = smul.addr %s23, 2
          %s170 = sadd.s32 %s165, %s169
          %s171 = smul.addr %s170, 64
          %s172 = scalar_lea.hbm %s0, %s171
          %s174 = sshll.u32 %s164, 4
          %s175 = int_to_ptr.vmem [resolvable:$true] %s174
          %177 = dma.hbm_to_vmem [thread:$0]  %s172, 128, %s175, %s161
        $region28: #{tpu_custom_call.1} parent=23 // pred_fallthru
          _
      $region24: #{tpu_custom_call.1} parent=5 // pred_fallthru
        _
      %p178 = scmp.le.s32.totalorder 1, %s16
      %p179 = scmp.lt.s32.totalorder %s16, 3
      %p180 = pnand %p178, %p179
      %p181 = pneg %p180
      // Predicated region
      $region29: #{tpu_custom_call.1} parent=5 // pred_check
        _
      $region30: #{tpu_custom_call.1} parent=5 // pred_check_branch
        %183 = sbr.rel (%p180) target = $region32
      $region31: #{tpu_custom_call.1} parent=5 // pred_region
        %s184 = ssub.s32 %s16, 1
        %s185 = sand.u32 %s43, 1
        %s186 = scalar_lea.sflag [#allocation4], %s185
        %s187 = sand.u32 %s43, 1
        %s188 = smul.addr %s187, 8
        %s189 = scalar_lea.vmem [#allocation3], %s188
        // Predicated region
        $region33: #{tpu_custom_call.1} parent=31 // pred_check
          %p190 = pneg %p56
        $region34: #{tpu_custom_call.1} parent=31 // pred_check_branch
          %192 = sbr.rel (%p190) target = $region36
        $region35: #{tpu_custom_call.1} parent=31 // pred_region
          %193 = dma.done %s186, 128
        $region36: #{tpu_custom_call.1} parent=31 // pred_fallthru
          _
        // Predicated region
        $region37: #{tpu_custom_call.1} parent=31 // pred_check
          %p194 = pneg %p77
        $region38: #{tpu_custom_call.1} parent=31 // pred_check_branch
          %196 = sbr.rel (%p194) target = $region40
        $region39: #{tpu_custom_call.1} parent=31 // pred_region
          %197 = dma.done [#allocation7], 64
        $region40: #{tpu_custom_call.1} parent=31 // pred_fallthru
          _
        %s198 = sand.u32 %s43, 1
        %s199 = scalar_lea.sflag [#allocation4], %s198
        %s200 = sand.u32 %s43, 1
        %s201 = smul.addr %s200, 8
        %s202 = scalar_lea.vmem [#allocation3], %s201
        %p203 = pneg %p56
        %p204 = pneg %p53
        %p205 = pneg %p77
        %p206 = pneg %p74
        %p207 = pneg %p98
        %p208 = pneg %p95
        %p209 = pneg %p124
        %p210 = pneg %p121
        %s211 = sand.u32 %s111, 1
        %s212 = scalar_lea.sflag [#allocation5], %s211
        %s213 = sand.u32 %s111, 1
        %s214 = scalar_lea.vmem [#allocation8], %s213
        %s215 = smul.u32 2, %s26
        %p216 = scmp.eq.s32.totalorder %s26, 0
        // Predicated region
        $region41: #{tpu_custom_call.1} parent=31 // pred_check
          %p217 = pneg %p216
        $region42: #{tpu_custom_call.1} parent=31 // pred_check_branch
          %219 = sbr.rel (%p217) target = $region44
        $region43: #{tpu_custom_call.1} parent=31 // pred_region
          %vm220 = vcmask 24576
          %221 = vst.msk [vmem:[#allocation2] sm:$0x1] %vm220, 0.0
        $region44: #{tpu_custom_call.1} parent=31 // pred_fallthru
          _
        %v222 = vld [vmem:[#allocation2] sm:$0x1]
        %v223 = vld [vmem:[%s189] sm:$0xff]
        %v225 = vcombine.high %v223, %v223
        %vm227 = vcmask 1043456
        %v228 = vsel %vm227, %v223, 0.0
        %v229 = vsel %vm227, %v225, 0.0
        %v230 = vadd.f32 %v228, %v229
        %231 = vadd.xlane.f32.xlu0 %v230
        %v232 = vpop.xlane.xlu0 %231
        %v234 = vlaneseq
        %v235 = vshrl.u32 %v234, 7
        %v236 = vsub.s32 0, %v235
        %v237 = vrot.slane %v232, %v236
        %v238 = vlaneseq
        %v239 = vshrl.u32 %v238, 7
        %v240 = vsub.s32 1, %v239
        %v241 = vrot.slane %v232, %v240
        %v242 = vlaneseq
        %v243 = vshrl.u32 %v242, 7
        %v244 = vsub.s32 2, %v243
        %v245 = vrot.slane %v232, %v244
        %v246 = vlaneseq
        %v247 = vshrl.u32 %v246, 7
        %v248 = vsub.s32 3, %v247
        %v249 = vrot.slane %v232, %v248
        %v250 = vcombine.low %v237, %v241
        %v251 = vcombine.low %v245, %v249
        %v253 = vunpack.c.l.s4 1966171168
        %v254 = vunpack.c.0.s8 %v253
        %v255 = vlaneseq
        %v256 = vshrl.u32 %v255, 7
        %v257 = vsub.s32 %v254, %v256
        %v258 = vrot.slane %v250, %v257
        %v260 = vunpack.c.l.s4 1966171168
        %v261 = vunpack.c.0.s8 %v260
        %v262 = vlaneseq
        %v263 = vshrl.u32 %v262, 7
        %v264 = vsub.s32 %v261, %v263
        %v265 = vrot.slane %v251, %v264
        %v266 = vcombine.low %v258, %v265
        %v268 = vunpack.c.l.s4 1966171168
        %v269 = vunpack.c.0.s8 %v268
        %v270 = vlaneseq
        %v271 = vshrl.u32 %v270, 7
        %v272 = vsub.s32 %v269, %v271
        %v273 = vrot.slane %v266, %v272
        %274 = vset.pattern.permute.xlu0 0
        %275 = vperm.xlu0 %274, %v273
        %v276 = vpop.permute.xlu0 %275
        %v277 = vlaneseq
        %v278 = vand.u32 %v277, 127
        %v279 = vlaneseq
        %v280 = vshrl.u32 %v279, 7
        %v281 = vsub.s32 %v278, %v280
        %v282 = vrot.slane %v276, %v281
        %v284 = vunpack.c.l.s4 1966171168
        %v285 = vunpack.c.0.s8 %v284
        %v286 = vlaneseq
        %v287 = vshrl.u32 %v286, 7
        %v288 = vsub.s32 %v285, %v287
        %v289 = vrot.slane %v282, %v288
        %v291 = vunpack.c.l.s4 1966171168
        %v292 = vunpack.c.0.s8 %v291
        %v293 = vlaneseq
        %v294 = vshrl.u32 %v293, 7
        %v295 = vsub.s32 %v292, %v294
        %v296 = vrot.slane %v289, %v295
        %v298 = vadd.f32 %v222, %v296
        %vm299 = vcmask 24576
        %300 = vst.msk [vmem:[#allocation2] sm:$0x1] %vm299, %v298
        // Predicated region
        $region45: #{tpu_custom_call.1} parent=31 // pred_check
          %p301 = pneg %p216
        $region46: #{tpu_custom_call.1} parent=31 // pred_check_branch
          %303 = sbr.rel (%p301) target = $region48
        $region47: #{tpu_custom_call.1} parent=31 // pred_region
          %v304 = vld [vmem:[#allocation2] sm:$0x1]
          %v305 = vmul.f32 %v304, 0.00390625
          %v306 = vld [vmem:[#allocation6] sm:$0xf]
          %v307 = vld [vmem:[%s2] sm:$0x1]
          %vm308 = vcmask 31744
          %v310 = vsel %vm308, %v305, 0
          %v313 = vsel %vm227, %v306, 0
          %315 = vmatprep.subr.mxu0 0.0
          %316 = vmatpush1.msra.mxu0 %v313
          %317 = vmatprep.subr.mxu0 0.0
          %318 = vmatpush1.msra.mxu0 0.0
          %319 = vmatprep.subr.mxu0 0.0
          %320 = vmatpush1.msra.mxu0 0.0
          %321 = vmatprep.subr.mxu0 0.0
          %322 = vmatpush1.msra.mxu0 0.0
          %323 = vmatprep.subr.mxu0 0.0
          %324 = vmatpush1.msra.mxu0 0.0
          %325 = vmatprep.subr.mxu0 0.0
          %326 = vmatpush1.msra.mxu0 0.0
          %327 = vmatprep.subr.mxu0 0.0
          %328 = vmatpush1.msra.mxu0 0.0
          %329 = vmatprep.subr.mxu0 0.0
          %330 = vmatpush1.msra.mxu0 0.0
          %331 = vmatprep.subr.mxu0 0.0
          %332 = vmatpush1.msra.mxu0 0.0
          %333 = vmatprep.subr.mxu0 0.0
          %334 = vmatpush1.msra.mxu0 0.0
          %335 = vmatprep.subr.mxu0 0.0
          %336 = vmatpush1.msra.mxu0 0.0
          %337 = vmatprep.subr.mxu0 0.0
          %338 = vmatpush1.msra.mxu0 0.0
          %339 = vmatprep.subr.mxu0 0.0
          %340 = vmatpush1.msra.mxu0 0.0
          %341 = vmatprep.subr.mxu0 0.0
          %342 = vmatpush1.msra.mxu0 0.0
          %343 = vmatprep.subr.mxu0 0.0
          %344 = vmatpush1.msra.mxu0 0.0
          %345 = vmatprep.subr.mxu0 0.0
          %346 = vmatpush1.msra.mxu0 0.0
          %347 = vmatprep.subr.mxu0 0.0
          %348 = vmatpush1.msra.mxu0 0.0
          %349 = vmatprep.subr.mxu0 0.0
          %350 = vmatpush1.msra.mxu0 0.0
          %351 = vmatprep.subr.mxu0 0.0
          %352 = vmatpush1.msra.mxu0 0.0
          %353 = vmatprep.subr.mxu0 0.0
          %354 = vmatpush1.msra.mxu0 0.0
          %355 = vmatprep.subr.mxu0 0.0
          %356 = vmatpush1.msra.mxu0 0.0
          %357 = vmatprep.subr.mxu0 0.0
          %358 = vmatpush1.msra.mxu0 0.0
          %359 = vmatprep.subr.mxu0 0.0
          %360 = vmatpush1.msra.mxu0 0.0
          %361 = vmatprep.subr.mxu0 0.0
          %362 = vmatpush1.msra.mxu0 0.0
          %363 = vmatprep.subr.mxu0 0.0
          %364 = vmatpush1.msra.mxu0 0.0
          %365 = vmatprep.subr.mxu0 0.0
          %366 = vmatpush1.msra.mxu0 0.0
          %367 = vmatprep.subr.mxu0 0.0
          %368 = vmatpush1.msra.mxu0 0.0
          %369 = vmatprep.subr.mxu0 0.0
          %370 = vmatpush1.msra.mxu0 0.0
          %371 = vmatprep.subr.mxu0 0.0
          %372 = vmatpush1.msra.mxu0 0.0
          %373 = vmatprep.subr.mxu0 0.0
          %374 = vmatpush1.msra.mxu0 0.0
          %375 = vmatprep.subr.mxu0 0.0
          %376 = vmatpush1.msra.mxu0 0.0
          %377 = vmatprep.subr.mxu0 0.0
          %378 = vmatpush1.msra.mxu0 0.0
          %379 = vmatprep.mubr.f32.mxu0 0.0
          %380 = vmatmul.mubr.f32.gmra.mrb[0].mxu0 %v310
          %v381 = vpop.f32.mrb[0].mxu0
          %v382 = vadd.f32 %v307, %v381
          %v383 = vpop.f32.mrb[0].mxu0
          %384 = vdwg.mxu0
          %385 = vst [vmem:[%s214] sm:$0x1] %v382
        $region48: #{tpu_custom_call.1} parent=31 // pred_fallthru
          _
        %s386 = sand.u32 %s111, 1
        %s387 = scalar_lea.sflag [#allocation5], %s386
        %s388 = sand.u32 %s111, 1
        %s389 = scalar_lea.vmem [#allocation8], %s388
        // Predicated region
        $region49: #{tpu_custom_call.1} parent=31 // pred_check
          %p390 = pneg %p121
        $region50: #{tpu_custom_call.1} parent=31 // pred_check_branch
          %392 = sbr.rel (%p390) target = $region52
        $region51: #{tpu_custom_call.1} parent=31 // pred_region
          %s394 = ssub.s32 16, 16
          %395 = vsyncadd %s387, %s394
          %s396 = smul.addr %s25, 16
          %s397 = scalar_lea.hbm %s3, %s396
          %s399 = sshll.u32 %s389, 4
          %s400 = int_to_ptr.vmem [resolvable:$true] %s399
          %402 = dma.vmem_to_hbm [thread:$0]  %s400, 16, %s397, %s387
        $region52: #{tpu_custom_call.1} parent=31 // pred_fallthru
          _
      $region32: #{tpu_custom_call.1} parent=5 // pred_fallthru
        _
      %p403 = scmp.le.s32.totalorder 2, %s16
      // Predicated region
      $region53: #{tpu_custom_call.1} parent=5 // pred_check
        %p404 = pneg %p403
      $region54: #{tpu_custom_call.1} parent=5 // pred_check_branch
        %406 = sbr.rel (%p404) target = $region56
      $region55: #{tpu_custom_call.1} parent=5 // pred_region
        %s407 = ssub.s32 %s16, 2
        // Predicated region
        $region57: #{tpu_custom_call.1} parent=55 // pred_check
          %p408 = pneg %p127
        $region58: #{tpu_custom_call.1} parent=55 // pred_check_branch
          %410 = sbr.rel (%p408) target = $region60
        $region59: #{tpu_custom_call.1} parent=55 // pred_region
          %s411 = sand.u32 %s112, 1
          %s412 = scalar_lea.sflag [#allocation5], %s411
          %s413 = sand.u32 %s112, 1
          %s414 = scalar_lea.vmem [#allocation8], %s413
          %415 = dma.done %s412, 16
        $region60: #{tpu_custom_call.1} parent=55 // pred_fallthru
          _
      $region56: #{tpu_custom_call.1} parent=5 // pred_fallthru
        _
    $region6: #{tpu_custom_call.1} parent=1 // loop_footer
      %s20 = sadd.s32 1, %s16
    $region7: #{tpu_custom_call.1} parent=1 // loop_footer_branch
      %15 = sbr.rel target = $region3
    $region8: #{tpu_custom_call.1} parent=1 // loop_exit
      _
    %416 = vsyncpa [#allocation4], 1
    %s417 = scalar_lea.sflag [#allocation4], 1
    %418 = vsyncpa %s417, 1
    %419 = vsyncpa [#allocation7], 1
    %420 = vsyncpa [#allocation5], 1
    %s421 = scalar_lea.sflag [#allocation5], 1
    %422 = vsyncpa %s421, 1

</llo_original>
